<compile_context>
chip_gen: v5e
topology: v5e:2x2
jax: 0.10.0
libtpu: 0.0.40
codegen_flags: <defaults>
</compile_context>

<pallas_src>
import functools
import math

import jax
import jax.numpy as jnp
from jax.experimental import pallas as pl
from jax.experimental.pallas import tpu as pltpu


def _round_up(x, m):
    return ((x + m - 1) // m) * m


def proxy_anchor_kernel(
    t_ref,      # (TILE_B, 1) int32 labels (-1 for padded rows)
    x_ref,      # (TILE_B, E_pad) embeddings
    p_ref,      # (E_pad, TILE_C) proxies (pre-transposed)
    logp_ref,   # (1, TILE_C) f32 out: log(1 + P_sim_sum) per class
    logn_ref,   # (1, TILE_C) f32 out: log(1 + N_sim_sum) per class
    cnt_ref,    # (1, TILE_C) f32 out: 1.0 if class present in batch else 0.0
    pn_cache,   # (E_pad, TILE_C) f32 scratch: normalized proxies for this c-tile
    p_acc,      # (1, TILE_C) f32 scratch
    n_acc,      # (1, TILE_C) f32 scratch
    c_acc,      # (1, TILE_C) f32 scratch
    *,
    mrg,
    alpha,
    nb_classes,
    tile_c,
):
    c = pl.program_id(0)
    b = pl.program_id(1)

    @pl.when(b == 0)
    def _():
        p_acc[...] = jnp.zeros_like(p_acc)
        n_acc[...] = jnp.zeros_like(n_acc)
        c_acc[...] = jnp.zeros_like(c_acc)
        # Normalize the proxy tile once per class tile, reuse for all b.
        p = p_ref[...].astype(jnp.float32)
        pn_cache[...] = p * jax.lax.rsqrt(
            jnp.sum(p * p, axis=0, keepdims=True) + 1e-12
        )

    x = x_ref[...].astype(jnp.float32)          # (TILE_B, E_pad)
    t = t_ref[...]                              # (TILE_B, 1) int32

    # l2 normalization via rsqrt (single EUP op per row + mul).
    xn = x * jax.lax.rsqrt(jnp.sum(x * x, axis=1, keepdims=True) + 1e-12)

    # cos similarity on the MXU: (TILE_B, E_pad) @ (E_pad, TILE_C).
    cos = jnp.dot(xn, pn_cache[...], preferred_element_type=jnp.float32)

    # Build one-hot / validity masks in-kernel from labels.
    col = jax.lax.broadcasted_iota(jnp.int32, cos.shape, 1) + c * tile_c
    oh = (col == t).astype(jnp.float32)                      # one-hot tile
    row_valid = (t >= 0).astype(jnp.float32)                 # (TILE_B, 1)
    col_valid = (col < nb_classes).astype(jnp.float32)       # mask padded classes

    # One exp; derive pos_exp exactly via the identity
    #   exp(-a*(cos-m)) * exp(a*(cos+m)) == exp(2*a*m).
    neg_exp = jnp.exp(alpha * (cos + mrg))
    pos_exp = jnp.float32(math.exp(2.0 * alpha * mrg)) / neg_exp

    p_acc[...] += jnp.sum(pos_exp * oh, axis=0, keepdims=True)
    n_acc[...] += jnp.sum(
        neg_exp * (row_valid * col_valid * (1.0 - oh)), axis=0, keepdims=True
    )
    c_acc[...] += jnp.sum(oh, axis=0, keepdims=True)

    @pl.when(b == pl.num_programs(1) - 1)
    def _():
        logp_ref[...] = jnp.log(1.0 + p_acc[...])   # absent/padded classes -> log(1)=0
        logn_ref[...] = jnp.log(1.0 + n_acc[...])   # padded classes masked -> 0
        cnt_ref[...] = (c_acc[...] > 0.0).astype(jnp.float32)


def proxy_anchor_loss(X, T, proxies, nb_classes, mrg=0.1, alpha=32.0):
    """X: (B, E) float, T: (B,) int labels, proxies: (C, E) float."""
    B, E = X.shape
    C = proxies.shape[0]

    TILE_B = min(128, _round_up(B, 8))
    TILE_C = min(256, _round_up(C, 128))
    B_pad = _round_up(B, TILE_B)
    C_pad = _round_up(C, TILE_C)
    E_pad = _round_up(E, 128)

    # Glue: zero-pad and pre-transpose proxies (padded rows get label -1 so
    # they drop out of every masked sum inside the kernel).
    Xp = jnp.zeros((B_pad, E_pad), X.dtype).at[:B, :E].set(X)
    Pt = jnp.zeros((E_pad, C_pad), proxies.dtype).at[:E, :C].set(proxies.T)
    Tp = jnp.full((B_pad, 1), -1, jnp.int32).at[:B, 0].set(T.astype(jnp.int32))

    num_c_tiles = C_pad // TILE_C
    num_b_tiles = B_pad // TILE_B

    kernel = functools.partial(
        proxy_anchor_kernel,
        mrg=float(mrg),
        alpha=float(alpha),
        nb_classes=nb_classes,
        tile_c=TILE_C,
    )

    out_block = pl.BlockSpec((1, TILE_C), lambda c, b: (0, c))
    logp, logn, cnt = pl.pallas_call(
        kernel,
        out_shape=(
            jax.ShapeDtypeStruct((1, C_pad), jnp.float32),
            jax.ShapeDtypeStruct((1, C_pad), jnp.float32),
            jax.ShapeDtypeStruct((1, C_pad), jnp.float32),
        ),
        grid_spec=pltpu.PrefetchScalarGridSpec(
            num_scalar_prefetch=0,
            grid=(num_c_tiles, num_b_tiles),
            in_specs=[
                pl.BlockSpec((TILE_B, 1), lambda c, b: (b, 0)),       # labels
                pl.BlockSpec((TILE_B, E_pad), lambda c, b: (b, 0)),   # X
                pl.BlockSpec((E_pad, TILE_C), lambda c, b: (0, c)),   # proxies.T
            ],
            out_specs=[out_block, out_block, out_block],
            scratch_shapes=[
                pltpu.VMEM((E_pad, TILE_C), jnp.float32),   # normalized proxy cache
                pltpu.VMEM((1, TILE_C), jnp.float32),
                pltpu.VMEM((1, TILE_C), jnp.float32),
                pltpu.VMEM((1, TILE_C), jnp.float32),
            ],
        ),
        compiler_params=pltpu.CompilerParams(
            dimension_semantics=("parallel", "arbitrary"),
            vmem_limit_bytes=64 << 20,
        ),
    )(Tp, Xp, Pt)

    # Tiny final reduction done in plain JAX (negligible cost).
    num_valid = jnp.sum(cnt)
    pos_term = jnp.sum(logp) / num_valid
    neg_term = jnp.sum(logn) / float(nb_classes)
    return pos_term + neg_term


def proxy_anchor_loss_ref(X, T, proxies, nb_classes, mrg=0.1, alpha=32.0):
    """Pure-JAX reference for sanity checking."""
    xn = X / jnp.sqrt(jnp.sum(X * X, axis=1, keepdims=True) + 1e-12)
    pn = proxies / jnp.sqrt(jnp.sum(proxies * proxies, axis=1, keepdims=True) + 1e-12)
    cos = xn @ pn.T
    oh = jax.nn.one_hot(T, nb_classes, dtype=jnp.float32)
    pos_exp = jnp.exp(-alpha * (cos - mrg))
    neg_exp = jnp.exp(alpha * (cos + mrg))
    p_sim = jnp.sum(jnp.where(oh == 1.0, pos_exp, 0.0), axis=0)
    n_sim = jnp.sum(jnp.where(oh == 0.0, neg_exp, 0.0), axis=0)
    num_valid = jnp.sum((jnp.sum(oh, axis=0) != 0).astype(jnp.float32))
    pos_term = jnp.sum(jnp.log(1.0 + p_sim)) / num_valid
    neg_term = jnp.sum(jnp.log(1.0 + n_sim)) / nb_classes
    return pos_term + neg_term


if __name__ == "__main__":
    mrg, alpha = 0.1, 32.0
    key = jax.random.PRNGKey(0)

    # --- small, single-tile case (matches the module's typical usage) ---
    nb_classes, sz_embed, batch = 8, 32, 8
    kx, kt, kp, key = jax.random.split(key, 4)
    X = jax.random.normal(kx, (batch, sz_embed), dtype=jnp.float32)
    T = jax.random.randint(kt, (batch,), 0, nb_classes, dtype=jnp.int32)
    # kaiming_normal_(mode='fan_out') on (nb_classes, sz_embed): std = sqrt(2/nb_classes)
    proxies = jax.random.normal(kp, (nb_classes, sz_embed), dtype=jnp.float32) * jnp.sqrt(
        2.0 / nb_classes
    )
    loss = proxy_anchor_loss(X, T, proxies, nb_classes, mrg=mrg, alpha=alpha)
    jax.block_until_ready(loss)
    loss_ref = proxy_anchor_loss_ref(X, T, proxies, nb_classes, mrg=mrg, alpha=alpha)
    assert jnp.allclose(loss, loss_ref, rtol=1e-4, atol=1e-4), (loss, loss_ref)

    # --- multi-tile / padded case (exercises accumulators and masking) ---
    nb_classes2, sz_embed2, batch2 = 300, 96, 200
    kx, kt, kp, key = jax.random.split(key, 4)
    X2 = jax.random.normal(kx, (batch2, sz_embed2), dtype=jnp.float32)
    T2 = jax.random.randint(kt, (batch2,), 0, nb_classes2, dtype=jnp.int32)
    proxies2 = jax.random.normal(
        kp, (nb_classes2, sz_embed2), dtype=jnp.float32
    ) * jnp.sqrt(2.0 / nb_classes2)
    loss2 = proxy_anchor_loss(X2, T2, proxies2, nb_classes2, mrg=mrg, alpha=alpha)
    jax.block_until_ready(loss2)
    loss2_ref = proxy_anchor_loss_ref(X2, T2, proxies2, nb_classes2, mrg=mrg, alpha=alpha)
    assert jnp.allclose(loss2, loss2_ref, rtol=1e-4, atol=1e-4), (loss2, loss2_ref)

    print("KERNEL_OK")
</pallas_src>

<mosaic_0001>
module attributes {stable_mosaic.version = 11 : i64} {
  func.func @proxy_anchor_kernel(%arg0: i32, %arg1: i32, %arg2: memref<8x1xi32, #tpu.memory_space<vmem>>, %arg3: memref<8x128xf32, #tpu.memory_space<vmem>>, %arg4: memref<128x128xf32, #tpu.memory_space<vmem>>, %arg5: memref<1x128xf32, #tpu.memory_space<vmem>>, %arg6: memref<1x128xf32, #tpu.memory_space<vmem>>, %arg7: memref<1x128xf32, #tpu.memory_space<vmem>>, %arg8: memref<128x128xf32, #tpu.memory_space<vmem>>, %arg9: memref<1x128xf32, #tpu.memory_space<vmem>>, %arg10: memref<1x128xf32, #tpu.memory_space<vmem>>, %arg11: memref<1x128xf32, #tpu.memory_space<vmem>>) attributes {dimension_semantics = [#tpu.dimension_semantics<parallel>, #tpu.dimension_semantics<arbitrary>], iteration_bounds = array<i64: 1, 1>, scalar_prefetch = 0 : i64, scratch_operands = 4 : i64, tpu.core_type = #tpu.core_type<tc>, window_params = [{transform_indices = @transform_0, window_bounds = array<i64: 8, 1>}, {transform_indices = @transform_1, window_bounds = array<i64: 8, 128>}, {transform_indices = @transform_2, window_bounds = array<i64: 128, 128>}, {transform_indices = @transform_3, window_bounds = array<i64: 1, 128>}, {transform_indices = @transform_4, window_bounds = array<i64: 1, 128>}, {transform_indices = @transform_5, window_bounds = array<i64: 1, 128>}]} {
    %c0_i32 = arith.constant 0 : i32
    %0 = arith.cmpi eq, %arg1, %c0_i32 : i32
    %1 = arith.extui %0 : i1 to i32
    %c0_i32_0 = arith.constant 0 : i32
    %2 = arith.cmpi ne, %1, %c0_i32_0 : i32
    scf.if %2 {
      %cst_30 = arith.constant 0.000000e+00 : f32
      %63 = vector.broadcast %cst_30 : f32 to vector<1x128xf32>
      %c0_31 = arith.constant 0 : index
      %c0_32 = arith.constant 0 : index
      %64 = vector.load %arg9[%c0_31, %c0_32] : memref<1x128xf32, #tpu.memory_space<vmem>>, vector<1x128xf32>
      tpu.vector_store %arg9[%c0_31, %c0_32], %63 {strides = array<i32>} : memref<1x128xf32, #tpu.memory_space<vmem>>, vector<1x128xf32>,
      %cst_33 = arith.constant 0.000000e+00 : f32
      %65 = vector.broadcast %cst_33 : f32 to vector<1x128xf32>
      %c0_34 = arith.constant 0 : index
      %c0_35 = arith.constant 0 : index
      %66 = vector.load %arg10[%c0_34, %c0_35] : memref<1x128xf32, #tpu.memory_space<vmem>>, vector<1x128xf32>
      tpu.vector_store %arg10[%c0_34, %c0_35], %65 {strides = array<i32>} : memref<1x128xf32, #tpu.memory_space<vmem>>, vector<1x128xf32>,
      %cst_36 = arith.constant 0.000000e+00 : f32
      %67 = vector.broadcast %cst_36 : f32 to vector<1x128xf32>
      %c0_37 = arith.constant 0 : index
      %c0_38 = arith.constant 0 : index
      %68 = vector.load %arg11[%c0_37, %c0_38] : memref<1x128xf32, #tpu.memory_space<vmem>>, vector<1x128xf32>
      tpu.vector_store %arg11[%c0_37, %c0_38], %67 {strides = array<i32>} : memref<1x128xf32, #tpu.memory_space<vmem>>, vector<1x128xf32>,
      %c0_39 = arith.constant 0 : index
      %c0_40 = arith.constant 0 : index
      %69 = vector.load %arg4[%c0_39, %c0_40] : memref<128x128xf32, #tpu.memory_space<vmem>>, vector<128x128xf32>
      %70 = arith.mulf %69, %69 : vector<128x128xf32>
      %cst_41 = arith.constant dense<0.000000e+00> : vector<128xf32>
      %71 = vector.multi_reduction <add>, %70, %cst_41 [0] : vector<128x128xf32> to vector<128xf32>
      %72 = vector.shape_cast %71 : vector<128xf32> to vector<1x128xf32>
      %cst_42 = arith.constant 9.99999996E-13 : f32
      %73 = vector.broadcast %cst_42 : f32 to vector<1x128xf32>
      %74 = arith.addf %72, %73 : vector<1x128xf32>
      %75 = math.rsqrt %74 : vector<1x128xf32>
      %76 = vector.broadcast %75 : vector<1x128xf32> to vector<128x128xf32>
      %77 = arith.mulf %69, %76 : vector<128x128xf32>
      %c0_43 = arith.constant 0 : index
      %c0_44 = arith.constant 0 : index
      %78 = vector.load %arg8[%c0_43, %c0_44] : memref<128x128xf32, #tpu.memory_space<vmem>>, vector<128x128xf32>
      tpu.vector_store %arg8[%c0_43, %c0_44], %77 {strides = array<i32>} : memref<128x128xf32, #tpu.memory_space<vmem>>, vector<128x128xf32>,
    } else {
    }
    %c0 = arith.constant 0 : index
    %c0_1 = arith.constant 0 : index
    %3 = vector.load %arg3[%c0, %c0_1] : memref<8x128xf32, #tpu.memory_space<vmem>>, vector<8x128xf32>
    %c0_2 = arith.constant 0 : index
    %c0_3 = arith.constant 0 : index
    %4 = vector.load %arg2[%c0_2, %c0_3] : memref<8x1xi32, #tpu.memory_space<vmem>>, vector<8x1xi32>
    %5 = arith.mulf %3, %3 : vector<8x128xf32>
    %cst = arith.constant dense<0.000000e+00> : vector<8xf32>
    %6 = vector.multi_reduction <add>, %5, %cst [1] : vector<8x128xf32> to vector<8xf32>
    %7 = vector.shape_cast %6 : vector<8xf32> to vector<8x1xf32>
    %cst_4 = arith.constant 9.99999996E-13 : f32
    %8 = vector.broadcast %cst_4 : f32 to vector<8x1xf32>
    %9 = arith.addf %7, %8 : vector<8x1xf32>
    %10 = math.rsqrt %9 : vector<8x1xf32>
    %11 = vector.broadcast %10 : vector<8x1xf32> to vector<8x128xf32>
    %12 = arith.mulf %3, %11 : vector<8x128xf32>
    %c0_5 = arith.constant 0 : index
    %c0_6 = arith.constant 0 : index
    %13 = vector.load %arg8[%c0_5, %c0_6] : memref<128x128xf32, #tpu.memory_space<vmem>>, vector<128x128xf32>
    %cst_7 = arith.constant dense<0.000000e+00> : vector<8x128xf32>
    %14 = tpu.matmul %12, %13, %cst_7 {dimension_numbers = #tpu.dot_dimension_numbers<[1], [0], [0], [1], [0, 0, 1, 1], [], []>} : vector<8x128xf32>, vector<128x128xf32>, vector<8x128xf32> -> vector<8x128xf32>
    %15 = tpu.iota {dimensions = array<i32: 1>} : vector<8x128xi32>
    %c128_i32 = arith.constant 128 : i32
    %16 = arith.muli %arg0, %c128_i32 : i32
    %17 = vector.broadcast %16 : i32 to vector<8x128xi32>
    %18 = arith.addi %15, %17 : vector<8x128xi32>
    %19 = vector.broadcast %4 : vector<8x1xi32> to vector<8x128xi32>
    %20 = arith.cmpi eq, %18, %19 : vector<8x128xi32>
    %21 = arith.extui %20 : vector<8x128xi1> to vector<8x128xi32>
    %22 = arith.sitofp %21 : vector<8x128xi32> to vector<8x128xf32>
    %c0_i32_8 = arith.constant 0 : i32
    %23 = vector.broadcast %c0_i32_8 : i32 to vector<8x1xi32>
    %24 = arith.cmpi sge, %4, %23 : vector<8x1xi32>
    %25 = arith.extui %24 : vector<8x1xi1> to vector<8x1xi32>
    %26 = arith.sitofp %25 : vector<8x1xi32> to vector<8x1xf32>
    %c8_i32 = arith.constant 8 : i32
    %27 = vector.broadcast %c8_i32 : i32 to vector<8x128xi32>
    %28 = arith.cmpi slt, %18, %27 : vector<8x128xi32>
    %29 = arith.extui %28 : vector<8x128xi1> to vector<8x128xi32>
    %30 = arith.sitofp %29 : vector<8x128xi32> to vector<8x128xf32>
    %cst_9 = arith.constant 1.000000e-01 : f32
    %31 = vector.broadcast %cst_9 : f32 to vector<8x128xf32>
    %32 = arith.addf %14, %31 : vector<8x128xf32>
    %cst_10 = arith.constant 3.200000e+01 : f32
    %33 = vector.broadcast %cst_10 : f32 to vector<8x128xf32>
    %34 = arith.mulf %33, %32 : vector<8x128xf32>
    %35 = math.exp %34 : vector<8x128xf32>
    %cst_11 = arith.constant 601.845032 : f32
    %36 = vector.broadcast %cst_11 : f32 to vector<8x128xf32>
    %37 = arith.divf %36, %35 : vector<8x128xf32>
    %c0_12 = arith.constant 0 : index
    %c0_13 = arith.constant 0 : index
    %38 = vector.load %arg9[%c0_12, %c0_13] : memref<1x128xf32, #tpu.memory_space<vmem>>, vector<1x128xf32>
    %39 = arith.mulf %37, %22 : vector<8x128xf32>
    %cst_14 = arith.constant dense<0.000000e+00> : vector<128xf32>
    %40 = vector.multi_reduction <add>, %39, %cst_14 [0] : vector<8x128xf32> to vector<128xf32>
    %41 = vector.shape_cast %40 : vector<128xf32> to vector<1x128xf32>
    %42 = arith.addf %38, %41 : vector<1x128xf32>
    %c0_15 = arith.constant 0 : index
    %c0_16 = arith.constant 0 : index
    %43 = vector.load %arg9[%c0_15, %c0_16] : memref<1x128xf32, #tpu.memory_space<vmem>>, vector<1x128xf32>
    tpu.vector_store %arg9[%c0_15, %c0_16], %42 {strides = array<i32>} : memref<1x128xf32, #tpu.memory_space<vmem>>, vector<1x128xf32>,
    %c0_17 = arith.constant 0 : index
    %c0_18 = arith.constant 0 : index
    %44 = vector.load %arg10[%c0_17, %c0_18] : memref<1x128xf32, #tpu.memory_space<vmem>>, vector<1x128xf32>
    %45 = vector.broadcast %26 : vector<8x1xf32> to vector<8x128xf32>
    %46 = arith.mulf %45, %30 : vector<8x128xf32>
    %cst_19 = arith.constant 1.000000e+00 : f32
    %47 = vector.broadcast %cst_19 : f32 to vector<8x128xf32>
    %48 = arith.subf %47, %22 : vector<8x128xf32>
    %49 = arith.mulf %46, %48 : vector<8x128xf32>
    %50 = arith.mulf %35, %49 : vector<8x128xf32>
    %cst_20 = arith.constant dense<0.000000e+00> : vector<128xf32>
    %51 = vector.multi_reduction <add>, %50, %cst_20 [0] : vector<8x128xf32> to vector<128xf32>
    %52 = vector.shape_cast %51 : vector<128xf32> to vector<1x128xf32>
    %53 = arith.addf %44, %52 : vector<1x128xf32>
    %c0_21 = arith.constant 0 : index
    %c0_22 = arith.constant 0 : index
    %54 = vector.load %arg10[%c0_21, %c0_22] : memref<1x128xf32, #tpu.memory_space<vmem>>, vector<1x128xf32>
    tpu.vector_store %arg10[%c0_21, %c0_22], %53 {strides = array<i32>} : memref<1x128xf32, #tpu.memory_space<vmem>>, vector<1x128xf32>,
    %c0_23 = arith.constant 0 : index
    %c0_24 = arith.constant 0 : index
    %55 = vector.load %arg11[%c0_23, %c0_24] : memref<1x128xf32, #tpu.memory_space<vmem>>, vector<1x128xf32>
    %cst_25 = arith.constant dense<0.000000e+00> : vector<128xf32>
    %56 = vector.multi_reduction <add>, %22, %cst_25 [0] : vector<8x128xf32> to vector<128xf32>
    %57 = vector.shape_cast %56 : vector<128xf32> to vector<1x128xf32>
    %58 = arith.addf %55, %57 : vector<1x128xf32>
    %c0_26 = arith.constant 0 : index
    %c0_27 = arith.constant 0 : index
    %59 = vector.load %arg11[%c0_26, %c0_27] : memref<1x128xf32, #tpu.memory_space<vmem>>, vector<1x128xf32>
    tpu.vector_store %arg11[%c0_26, %c0_27], %58 {strides = array<i32>} : memref<1x128xf32, #tpu.memory_space<vmem>>, vector<1x128xf32>,
    %c0_i32_28 = arith.constant 0 : i32
    %60 = arith.cmpi eq, %arg1, %c0_i32_28 : i32
    %61 = arith.extui %60 : i1 to i32
    %c0_i32_29 = arith.constant 0 : i32
    %62 = arith.cmpi ne, %61, %c0_i32_29 : i32
    scf.if %62 {
      %c0_30 = arith.constant 0 : index
      %c0_31 = arith.constant 0 : index
      %63 = vector.load %arg9[%c0_30, %c0_31] : memref<1x128xf32, #tpu.memory_space<vmem>>, vector<1x128xf32>
      %cst_32 = arith.constant 1.000000e+00 : f32
      %64 = vector.broadcast %cst_32 : f32 to vector<1x128xf32>
      %65 = arith.addf %64, %63 : vector<1x128xf32>
      %66 = math.log %65 : vector<1x128xf32>
      %c0_33 = arith.constant 0 : index
      %c0_34 = arith.constant 0 : index
      %67 = vector.load %arg5[%c0_33, %c0_34] : memref<1x128xf32, #tpu.memory_space<vmem>>, vector<1x128xf32>
      tpu.vector_store %arg5[%c0_33, %c0_34], %66 {strides = array<i32>} : memref<1x128xf32, #tpu.memory_space<vmem>>, vector<1x128xf32>,
      %c0_35 = arith.constant 0 : index
      %c0_36 = arith.constant 0 : index
      %68 = vector.load %arg10[%c0_35, %c0_36] : memref<1x128xf32, #tpu.memory_space<vmem>>, vector<1x128xf32>
      %cst_37 = arith.constant 1.000000e+00 : f32
      %69 = vector.broadcast %cst_37 : f32 to vector<1x128xf32>
      %70 = arith.addf %69, %68 : vector<1x128xf32>
      %71 = math.log %70 : vector<1x128xf32>
      %c0_38 = arith.constant 0 : index
      %c0_39 = arith.constant 0 : index
      %72 = vector.load %arg6[%c0_38, %c0_39] : memref<1x128xf32, #tpu.memory_space<vmem>>, vector<1x128xf32>
      tpu.vector_store %arg6[%c0_38, %c0_39], %71 {strides = array<i32>} : memref<1x128xf32, #tpu.memory_space<vmem>>, vector<1x128xf32>,
      %c0_40 = arith.constant 0 : index
      %c0_41 = arith.constant 0 : index
      %73 = vector.load %arg11[%c0_40, %c0_41] : memref<1x128xf32, #tpu.memory_space<vmem>>, vector<1x128xf32>
      %cst_42 = arith.constant 0.000000e+00 : f32
      %74 = vector.broadcast %cst_42 : f32 to vector<1x128xf32>
      %75 = arith.cmpf ogt, %73, %74 : vector<1x128xf32>
      %76 = arith.extui %75 : vector<1x128xi1> to vector<1x128xi32>
      %77 = arith.sitofp %76 : vector<1x128xi32> to vector<1x128xf32>
      %c0_43 = arith.constant 0 : index
      %c0_44 = arith.constant 0 : index
      %78 = vector.load %arg7[%c0_43, %c0_44] : memref<1x128xf32, #tpu.memory_space<vmem>>, vector<1x128xf32>
      tpu.vector_store %arg7[%c0_43, %c0_44], %77 {strides = array<i32>} : memref<1x128xf32, #tpu.memory_space<vmem>>, vector<1x128xf32>,
    } else {
    }
    return
  }
  func.func @transform_0(%arg0: i32, %arg1: i32) -> (i32, i32) {
    %c0_i32 = arith.constant 0 : i32
    %c0_i32_0 = arith.constant 0 : i32
    return %arg1, %c0_i32 : i32, i32
  }
  func.func @transform_1(%arg0: i32, %arg1: i32) -> (i32, i32) {
    %c0_i32 = arith.constant 0 : i32
    %c0_i32_0 = arith.constant 0 : i32
    return %arg1, %c0_i32 : i32, i32
  }
  func.func @transform_2(%arg0: i32, %arg1: i32) -> (i32, i32) {
    %c0_i32 = arith.constant 0 : i32
    %c0_i32_0 = arith.constant 0 : i32
    return %c0_i32, %arg0 : i32, i32
  }
  func.func @transform_3(%arg0: i32, %arg1: i32) -> (i32, i32) {
    %c0_i32 = arith.constant 0 : i32
    %c0_i32_0 = arith.constant 0 : i32
    return %c0_i32, %arg0 : i32, i32
  }
  func.func @transform_4(%arg0: i32, %arg1: i32) -> (i32, i32) {
    %c0_i32 = arith.constant 0 : i32
    %c0_i32_0 = arith.constant 0 : i32
    return %c0_i32, %arg0 : i32, i32
  }
  func.func @transform_5(%arg0: i32, %arg1: i32) -> (i32, i32) {
    %c0_i32 = arith.constant 0 : i32
    %c0_i32_0 = arith.constant 0 : i32
    return %c0_i32, %arg0 : i32, i32
  }
}

</mosaic_0001>

<llo_original>
// kernel: tpu_custom_call.1
$region0: #{tpu_custom_call.1}
  #allocation0 [shape = 'u32[]', space=smem, size = 0x4, offset = 0x4, fixed_abs, tag = 'smem constant byte address 0x4 - core index']
  #allocation1 [shape = 'u32[72,128]{1,0:T(1,128)}', space=vmem, size = 0x9000, scoped, tag = 'internal scratch']
  #allocation2 [shape = 'f32[128,128]{1,0:T(8,128)}', space=vmem, size = 0x10000, scoped, tag = 'scratch operand']
  #allocation3 [shape = 'f32[1,128]{1,0:T(1,128)}', space=vmem, size = 0x200, scoped, tag = 'scratch operand']
  #allocation4 [shape = 'f32[1,128]{1,0:T(1,128)}', space=vmem, size = 0x200, scoped, tag = 'scratch operand']
  #allocation5 [shape = 'f32[1,128]{1,0:T(1,128)}', space=vmem, size = 0x200, scoped, tag = 'scratch operand']
  %s0 = inlined_call_operand.vmem [shape: s32[8,1], index: 0, kind: input, shape index: {}]
  %s1 = inlined_call_operand.vmem [shape: f32[8,128], index: 1, kind: input, shape index: {}]
  %s2 = inlined_call_operand.hbm [shape: f32[128,128], index: 2, kind: input, shape index: {}]
  %s3 = inlined_call_operand.hbm [shape: f32[1,128], index: 3, kind: output, shape index: {0}]
  %s4 = inlined_call_operand.hbm [shape: f32[1,128], index: 4, kind: output, shape index: {1}]
  %s5 = inlined_call_operand.hbm [shape: f32[1,128], index: 5, kind: output, shape index: {2}]
  %6 = xla_tuple %s3, %s4, %s5
  %s7 = sld [smem:[#allocation0]]
  $region50: #{tpu_custom_call.1} parent=0
    _
  %s9 = ssub.s32 1, %s7
  %s10 = scalar_select 0, %s9, %s7
  $region1: #{tpu_custom_call.1} parent=0
    #allocation6 [shape = 'u8[65536]{0}', space=vmem, size = 0x10000, scoped, tag = 'input window, operand 2, single buffered']
    #allocation7 [shape = 's32[1]{0}', space=sflag, size = 0x4, scoped, tag = 'scoped memory for tpu_custom_call.1']
    #allocation8 [shape = 's32[1]{0}', space=sflag, size = 0x4, scoped, tag = 'scoped memory for tpu_custom_call.1']
    #allocation9 [shape = 'u8[512]{0}', space=vmem, size = 0x400, scoped, tag = 'output window, operand 0, single buffered']
    #allocation10 [shape = 'u8[512]{0}', space=vmem, size = 0x400, scoped, tag = 'output window, operand 1, single buffered']
    #allocation11 [shape = 's32[1]{0}', space=sflag, size = 0x4, scoped, tag = 'scoped memory for tpu_custom_call.1']
    #allocation12 [shape = 'u8[512]{0}', space=vmem, size = 0x400, scoped, tag = 'output window, operand 2, single buffered']
    %11 = vsyncpa [#allocation7], 0
    %12 = vsyncpa [#allocation8], 0
    %13 = vsyncpa [#allocation11], 0
    // Predicated region
    $region2: #{tpu_custom_call.1} parent=1 // pred_check
      _
    $region3: #{tpu_custom_call.1} parent=1 // pred_check_branch
      %15 = sbr.rel (0) target = $region5
    $region4: #{tpu_custom_call.1} parent=1 // pred_region
      _
    $region5: #{tpu_custom_call.1} parent=1 // pred_fallthru
      _
    // Predicated region
    $region6: #{tpu_custom_call.1} parent=1 // pred_check
      _
    $region7: #{tpu_custom_call.1} parent=1 // pred_check_branch
      %17 = sbr.rel (0) target = $region9
    $region8: #{tpu_custom_call.1} parent=1 // pred_region
      _
    $region9: #{tpu_custom_call.1} parent=1 // pred_fallthru
      _
    // Predicated region
    $region10: #{tpu_custom_call.1} parent=1 // pred_check
      _
    $region11: #{tpu_custom_call.1} parent=1 // pred_check_branch
      %19 = sbr.rel (0) target = $region13
    $region12: #{tpu_custom_call.1} parent=1 // pred_region
      %21 = vsyncadd [#allocation7], 0
      %s22 = sshll.u32 %s2, 4
      %s23 = int_to_ptr.hbm [resolvable:$true] %s22
      %s24 = sshll.u32 [#allocation6], 4
      %s25 = int_to_ptr.vmem [resolvable:$true] %s24
      %30 = dma.hbm_to_vmem [thread:$0]  %s23, 2048, %s25, [#allocation7], 128, 128, 8
    $region13: #{tpu_custom_call.1} parent=1 // pred_fallthru
      _
    // Predicated region
    $region14: #{tpu_custom_call.1} parent=1 // pred_check
      _
    $region15: #{tpu_custom_call.1} parent=1 // pred_check_branch
      %32 = sbr.rel (0) target = $region17
    $region16: #{tpu_custom_call.1} parent=1 // pred_region
      %34 = dma.done [#allocation7], 2048
    $region17: #{tpu_custom_call.1} parent=1 // pred_fallthru
      _
    %p35 = scmp.eq.s32.totalorder 0, 0
    // Predicated region
    $region18: #{tpu_custom_call.1} parent=1 // pred_check
      %p36 = pneg %p35
    $region19: #{tpu_custom_call.1} parent=1 // pred_check_branch
      %38 = sbr.rel (%p36) target = $region21
    $region20: #{tpu_custom_call.1} parent=1 // pred_region
      %39 = vst [vmem:[#allocation3] sm:$0x1] 0.0
      %40 = vst [vmem:[#allocation4] sm:$0x1] 0.0
      %41 = vst [vmem:[#allocation5] sm:$0x1] 0.0
      %v42 = vld [vmem:[#allocation6] sm:$0xff]
      %v43 = vld [vmem:[#allocation6 + $0x8] sm:$0xff]
      %v44 = vld [vmem:[#allocation6 + $0x10] sm:$0xff]
      %v45 = vld [vmem:[#allocation6 + $0x18] sm:$0xff]
      %v46 = vld [vmem:[#allocation6 + $0x20] sm:$0xff]
      %v47 = vld [vmem:[#allocation6 + $0x28] sm:$0xff]
      %v48 = vld [vmem:[#allocation6 + $0x30] sm:$0xff]
      %v49 = vld [vmem:[#allocation6 + $0x38] sm:$0xff]
      %v50 = vld [vmem:[#allocation6 + $0x40] sm:$0xff]
      %v51 = vld [vmem:[#allocation6 + $0x48] sm:$0xff]
      %v52 = vld [vmem:[#allocation6 + $0x50] sm:$0xff]
      %v53 = vld [vmem:[#allocation6 + $0x58] sm:$0xff]
      %v54 = vld [vmem:[#allocation6 + $0x60] sm:$0xff]
      %v55 = vld [vmem:[#allocation6 + $0x68] sm:$0xff]
      %v56 = vld [vmem:[#allocation6 + $0x70] sm:$0xff]
      %v57 = vld [vmem:[#allocation6 + $0x78] sm:$0xff]
      %v58 = vmul.f32 %v42, %v42
      %v59 = vmul.f32 %v43, %v43
      %v60 = vmul.f32 %v44, %v44
      %v61 = vmul.f32 %v45, %v45
      %v62 = vmul.f32 %v46, %v46
      %v63 = vmul.f32 %v47, %v47
      %v64 = vmul.f32 %v48, %v48
      %v65 = vmul.f32 %v49, %v49
      %v66 = vmul.f32 %v50, %v50
      %v67 = vmul.f32 %v51, %v51
      %v68 = vmul.f32 %v52, %v52
      %v69 = vmul.f32 %v53, %v53
      %v70 = vmul.f32 %v54, %v54
      %v71 = vmul.f32 %v55, %v55
      %v72 = vmul.f32 %v56, %v56
      %v73 = vmul.f32 %v57, %v57
      %v74 = vadd.f32 %v58, %v59
      %v75 = vadd.f32 %v74, %v60
      %v76 = vadd.f32 %v75, %v61
      %v77 = vadd.f32 %v76, %v62
      %v78 = vadd.f32 %v77, %v63
      %v79 = vadd.f32 %v78, %v64
      %v80 = vadd.f32 %v79, %v65
      %v81 = vadd.f32 %v80, %v66
      %v82 = vadd.f32 %v81, %v67
      %v83 = vadd.f32 %v82, %v68
      %v84 = vadd.f32 %v83, %v69
      %v85 = vadd.f32 %v84, %v70
      %v86 = vadd.f32 %v85, %v71
      %v87 = vadd.f32 %v86, %v72
      %v88 = vadd.f32 %v87, %v73
      %v89 = vrot.slane %v88, 4
      %v90 = vadd.f32 %v88, %v89
      %v91 = vrot.slane %v90, 2
      %v92 = vadd.f32 %v90, %v91
      %v93 = vrot.slane %v92, 1
      %v94 = vadd.f32 %v92, %v93
      %v95 = vadd.f32 %v94, 1e-12
      %v96 = vrsqrt.pop %v95
      %v97 = vmul.f32 %v96, %v95
      %v98 = vmul.f32 %v97, %v96
      %v99 = vmul.f32 0.5, %v98
      %v100 = vsub.f32 1.5, %v99
      %v101 = vmul.f32 %v96, %v100
      %vm102 = vweird.f32 %v95
      %vm103 = vweird.f32 %v96
      %vm104 = vmor %vm102, %vm103
      %v105 = vsel %vm104, %v96, %v101
      %v106 = vmul.f32 %v42, %v105
      %v107 = vmul.f32 %v43, %v105
      %v108 = vmul.f32 %v44, %v105
      %v109 = vmul.f32 %v45, %v105
      %v110 = vmul.f32 %v46, %v105
      %v111 = vmul.f32 %v47, %v105
      %v112 = vmul.f32 %v48, %v105
      %v113 = vmul.f32 %v49, %v105
      %v114 = vmul.f32 %v50, %v105
      %v115 = vmul.f32 %v51, %v105
      %v116 = vmul.f32 %v52, %v105
      %v117 = vmul.f32 %v53, %v105
      %v118 = vmul.f32 %v54, %v105
      %v119 = vmul.f32 %v55, %v105
      %v120 = vmul.f32 %v56, %v105
      %v121 = vmul.f32 %v57, %v105
      %122 = vst [vmem:[#allocation2] sm:$0xff] %v106
      %123 = vst [vmem:[#allocation2 + $0x8] sm:$0xff] %v107
      %124 = vst [vmem:[#allocation2 + $0x10] sm:$0xff] %v108
      %125 = vst [vmem:[#allocation2 + $0x18] sm:$0xff] %v109
      %126 = vst [vmem:[#allocation2 + $0x20] sm:$0xff] %v110
      %127 = vst [vmem:[#allocation2 + $0x28] sm:$0xff] %v111
      %128 = vst [vmem:[#allocation2 + $0x30] sm:$0xff] %v112
      %129 = vst [vmem:[#allocation2 + $0x38] sm:$0xff] %v113
      %130 = vst [vmem:[#allocation2 + $0x40] sm:$0xff] %v114
      %131 = vst [vmem:[#allocation2 + $0x48] sm:$0xff] %v115
      %132 = vst [vmem:[#allocation2 + $0x50] sm:$0xff] %v116
      %133 = vst [vmem:[#allocation2 + $0x58] sm:$0xff] %v117
      %134 = vst [vmem:[#allocation2 + $0x60] sm:$0xff] %v118
      %135 = vst [vmem:[#allocation2 + $0x68] sm:$0xff] %v119
      %136 = vst [vmem:[#allocation2 + $0x70] sm:$0xff] %v120
      %137 = vst [vmem:[#allocation2 + $0x78] sm:$0xff] %v121
    $region21: #{tpu_custom_call.1} parent=1 // pred_fallthru
      _
    %v138 = vld [vmem:[%s1] sm:$0xff]
    %v139 = vld [vmem:[%s0] sm:$0xff]
    %v140 = vmul.f32 %v138, %v138
    %141 = vadd.xlane.f32.xlu0 %v140
    %v142 = vpop.xlane.xlu0 %141
    %v143 = vadd.f32 %v142, 1e-12
    %v144 = vrsqrt.pop %v143
    %v145 = vmul.f32 %v144, %v143
    %v146 = vmul.f32 %v145, %v144
    %v147 = vmul.f32 0.5, %v146
    %v148 = vsub.f32 1.5, %v147
    %v149 = vmul.f32 %v144, %v148
    %vm150 = vweird.f32 %v143
    %vm151 = vweird.f32 %v144
    %vm152 = vmor %vm150, %vm151
    %v153 = vsel %vm152, %v144, %v149
    %v154 = vmul.f32 %v138, %v153
    %v155 = vld [vmem:[#allocation2] sm:$0xff]
    %v156 = vld [vmem:[#allocation2 + $0x8] sm:$0xff]
    %v157 = vld [vmem:[#allocation2 + $0x10] sm:$0xff]
    %v158 = vld [vmem:[#allocation2 + $0x18] sm:$0xff]
    %v159 = vld [vmem:[#allocation2 + $0x20] sm:$0xff]
    %v160 = vld [vmem:[#allocation2 + $0x28] sm:$0xff]
    %v161 = vld [vmem:[#allocation2 + $0x30] sm:$0xff]
    %v162 = vld [vmem:[#allocation2 + $0x38] sm:$0xff]
    %v163 = vld [vmem:[#allocation2 + $0x40] sm:$0xff]
    %v164 = vld [vmem:[#allocation2 + $0x48] sm:$0xff]
    %v165 = vld [vmem:[#allocation2 + $0x50] sm:$0xff]
    %v166 = vld [vmem:[#allocation2 + $0x58] sm:$0xff]
    %v167 = vld [vmem:[#allocation2 + $0x60] sm:$0xff]
    %v168 = vld [vmem:[#allocation2 + $0x68] sm:$0xff]
    %v169 = vld [vmem:[#allocation2 + $0x70] sm:$0xff]
    %v170 = vld [vmem:[#allocation2 + $0x78] sm:$0xff]
    %v171 = vlaneseq
    %v172 = vand.u32 %v171, 127
    %s173 = smul.u32 0, 128
    %v174 = vstv %s173
    %v175 = vadd.s32 %v172, %v174
    %176 = vset.pattern.permute.xlu0 0
    %177 = vperm.xlu0 %176, %v139
    %v178 = vpop.permute.xlu0 %177
    %vm179 = vcmp.eq.s32.totalorder %v175, %v178
    %v180 = vsel %vm179, 1, 0
    %v181 = vcvt.s32.f32 %v180
    %vm182 = vcmp.ge.s32.totalorder %v139, 0
    %v183 = vsel %vm182, 1, 0
    %v184 = vcvt.s32.f32 %v183
    %vm185 = vcmp.lt.s32.totalorder %v175, 8
    %v186 = vsel %vm185, 1, 0
    %v187 = vcvt.s32.f32 %v186
    %188 = vmatpush.msra.mxu0 %v170
    %189 = vmatpush.msra.mxu0 %v169
    %190 = vmatpush.msra.mxu0 %v168
    %191 = vmatpush.msra.mxu0 %v167
    %192 = vmatpush.msra.mxu0 %v166
    %193 = vmatpush.msra.mxu0 %v165
    %194 = vmatpush.msra.mxu0 %v164
    %195 = vmatpush.msra.mxu0 %v163
    %196 = vmatpush.msra.mxu0 %v162
    %197 = vmatpush.msra.mxu0 %v161
    %198 = vmatpush.msra.mxu0 %v160
    %199 = vmatpush.msra.mxu0 %v159
    %200 = vmatpush.msra.mxu0 %v158
    %201 = vmatpush.msra.mxu0 %v157
    %202 = vmatpush.msra.mxu0 %v156
    %203 = vmatpush.msra.mxu0 %v155
    %204 = vmatmul.f32.gmra.mxu0 %v154
    %v205 = vpop.f32.mrf.mxu0
    %v206 = vadd.f32 0.1, %v205
    %207 = vdwg.mxu0
    %v208 = vmul.f32 %v206, 32.0
    %v209 = vmul.f32 %v208, 1.442695
    %v210 = vpow.pop %v209
    %v211 = vrcp.pop %v210
    %v212 = vmul.f32 %v210, %v211
    %v213 = vsub.f32 1.0, %v212
    %v214 = vmul.f32 %v211, %v213
    %v215 = vadd.f32 %v211, %v214
    %vm216 = vweird.f32 %v210
    %vm217 = vweird.f32 %v211
    %vm218 = vmor %vm216, %vm217
    %v219 = vsel %vm218, %v211, %v215
    %v220 = vand.u32 2147483647, %v210
    %vm221 = vcmp.eq.f32.partialorder %v220, 8.507059e+37
    %v222 = vand.u32 %v210, 2147483648
    %v223 = vor.u32 1.1754944e-38, %v222
    %v224 = vsel %vm221, %v223, %v219
    %v225 = vmul.f32 601.84503, %v224
    %v226 = vld [vmem:[#allocation3] sm:$0x1]
    %v227 = vmul.f32 %v225, %v181
    %v228 = vrot.slane %v227, 4
    %v229 = vadd.f32 %v227, %v228
    %v230 = vrot.slane %v229, 2
    %v231 = vadd.f32 %v229, %v230
    %v232 = vrot.slane %v231, 1
    %v233 = vadd.f32 %v231, %v232
    %v234 = vadd.f32 %v226, %v233
    %235 = vst [vmem:[#allocation3] sm:$0x1] %v234
    %v236 = vld [vmem:[#allocation4] sm:$0x1]
    %238 = vset.pattern.permute.xlu0 0
    %239 = vperm.xlu0 %238, %v184
    %v240 = vpop.permute.xlu0 %239
    %v242 = vmul.f32 %v240, %v187
    %v243 = vsub.f32 1.0, %v181
    %v244 = vmul.f32 %v242, %v243
    %v245 = vmul.f32 %v210, %v244
    %v246 = vrot.slane %v245, 4
    %v247 = vadd.f32 %v245, %v246
    %v248 = vrot.slane %v247, 2
    %v249 = vadd.f32 %v247, %v248
    %v250 = vrot.slane %v249, 1
    %v251 = vadd.f32 %v249, %v250
    %v252 = vadd.f32 %v236, %v251
    %253 = vst [vmem:[#allocation4] sm:$0x1] %v252
    %v254 = vld [vmem:[#allocation5] sm:$0x1]
    %v255 = vrot.slane %v181, 4
    %v256 = vadd.f32 %v181, %v255
    %v257 = vrot.slane %v256, 2
    %v258 = vadd.f32 %v256, %v257
    %v259 = vrot.slane %v258, 1
    %v260 = vadd.f32 %v258, %v259
    %v261 = vadd.f32 %v254, %v260
    %262 = vst [vmem:[#allocation5] sm:$0x1] %v261
    // Predicated region
    $region22: #{tpu_custom_call.1} parent=1 // pred_check
      %p263 = pneg %p35
    $region23: #{tpu_custom_call.1} parent=1 // pred_check_branch
      %265 = sbr.rel (%p263) target = $region25
    $region24: #{tpu_custom_call.1} parent=1 // pred_region
      %v266 = vld [vmem:[#allocation3] sm:$0x1]
      %v267 = vadd.f32 %v266, 1.0
      %v268 = vlog2.pop %v267
      %v269 = vmul.f32 %v268, 0.6931472
      %270 = vst [vmem:[#allocation9] sm:$0x1] %v269
      %v271 = vld [vmem:[#allocation4] sm:$0x1]
      %v272 = vadd.f32 %v271, 1.0
      %v273 = vlog2.pop %v272
      %v274 = vmul.f32 %v273, 0.6931472
      %275 = vst [vmem:[#allocation10] sm:$0x1] %v274
      %v276 = vld [vmem:[#allocation5] sm:$0x1]
      %vm277 = vcmp.gt.f32.partialorder %v276, 0.0
      %v278 = vsel %vm277, 1, 0
      %v279 = vcvt.s32.f32 %v278
      %280 = vst [vmem:[#allocation12] sm:$0x1] %v279
    $region25: #{tpu_custom_call.1} parent=1 // pred_fallthru
      _
    // Predicated region
    $region26: #{tpu_custom_call.1} parent=1 // pred_check
      _
    $region27: #{tpu_custom_call.1} parent=1 // pred_check_branch
      %282 = sbr.rel (0) target = $region29
    $region28: #{tpu_custom_call.1} parent=1 // pred_region
      %284 = vsyncadd [#allocation8], 0
      %s286 = sshll.u32 [#allocation9], 4
      %s287 = int_to_ptr.vmem [resolvable:$true] %s286
      %s288 = sshll.u32 %s3, 4
      %s289 = int_to_ptr.hbm [resolvable:$true] %s288
      %291 = dma.vmem_to_hbm [thread:$0]  %s287, 16, %s289, [#allocation8]
    $region29: #{tpu_custom_call.1} parent=1 // pred_fallthru
      _
    // Predicated region
    $region30: #{tpu_custom_call.1} parent=1 // pred_check
      _
    $region31: #{tpu_custom_call.1} parent=1 // pred_check_branch
      %293 = sbr.rel (0) target = $region33
    $region32: #{tpu_custom_call.1} parent=1 // pred_region
      %295 = vsyncadd [#allocation11], 0
      %s297 = sshll.u32 [#allocation10], 4
      %s298 = int_to_ptr.vmem [resolvable:$true] %s297
      %s299 = sshll.u32 %s4, 4
      %s300 = int_to_ptr.hbm [resolvable:$true] %s299
      %302 = dma.vmem_to_hbm [thread:$0]  %s298, 16, %s300, [#allocation11]
    $region33: #{tpu_custom_call.1} parent=1 // pred_fallthru
      _
    // Predicated region
    $region34: #{tpu_custom_call.1} parent=1 // pred_check
      _
    $region35: #{tpu_custom_call.1} parent=1 // pred_check_branch
      %304 = sbr.rel (0) target = $region37
    $region36: #{tpu_custom_call.1} parent=1 // pred_region
      %306 = vsyncadd [#allocation11], 0
      %s308 = sshll.u32 [#allocation12], 4
      %s309 = int_to_ptr.vmem [resolvable:$true] %s308
      %s310 = sshll.u32 %s5, 4
      %s311 = int_to_ptr.hbm [resolvable:$true] %s310
      %313 = dma.vmem_to_hbm [thread:$0]  %s309, 16, %s311, [#allocation11]
    $region37: #{tpu_custom_call.1} parent=1 // pred_fallthru
      _
    // Predicated region
    $region38: #{tpu_custom_call.1} parent=1 // pred_check
      _
    $region39: #{tpu_custom_call.1} parent=1 // pred_check_branch
      %315 = sbr.rel (0) target = $region41
    $region40: #{tpu_custom_call.1} parent=1 // pred_region
      %317 = dma.done [#allocation8], 16
    $region41: #{tpu_custom_call.1} parent=1 // pred_fallthru
      _
    // Predicated region
    $region42: #{tpu_custom_call.1} parent=1 // pred_check
      _
    $region43: #{tpu_custom_call.1} parent=1 // pred_check_branch
      %319 = sbr.rel (0) target = $region45
    $region44: #{tpu_custom_call.1} parent=1 // pred_region
      %321 = dma.done [#allocation11], 16
    $region45: #{tpu_custom_call.1} parent=1 // pred_fallthru
      _
    // Predicated region
    $region46: #{tpu_custom_call.1} parent=1 // pred_check
      _
    $region47: #{tpu_custom_call.1} parent=1 // pred_check_branch
      %323 = sbr.rel (0) target = $region49
    $region48: #{tpu_custom_call.1} parent=1 // pred_region
      %325 = dma.done [#allocation11], 16
    $region49: #{tpu_custom_call.1} parent=1 // pred_fallthru
      _
    %326 = vsyncpa [#allocation7], 1
    %327 = vsyncpa [#allocation8], 1
    %328 = vsyncpa [#allocation11], 1

</llo_original>
